<compile_context>
chip_gen: v5e
topology: v5e:2x2
jax: 0.10.0
libtpu: 0.0.40
codegen_flags: <defaults>
</compile_context>

<pallas_src>
import functools

import jax
import jax.numpy as jnp
from jax.experimental import pallas as pl
from jax.experimental.pallas import tpu as pltpu

_EPS = 1e-5  # PyTorch BatchNorm2d default eps


# ----------------------------- Pallas kernel --------------------------------

def _bn_scale_shift(y, gamma, beta, n, lane_mask):
    """Training-mode BN folded to a per-channel affine (scale, shift).

    y has layout (C, R_padded); statistics are per-channel over the lane axis.
    Two-pass (mean, then centered sum of squares), biased variance, with padded
    lanes masked out so they never perturb the batch statistics."""
    inv_n = 1.0 / float(n)
    ym = y * lane_mask
    mean = jnp.sum(ym, axis=1, keepdims=True) * inv_n
    d = (ym - mean) * lane_mask
    var = jnp.sum(d * d, axis=1, keepdims=True) * inv_n
    scale = gamma * jax.lax.rsqrt(var + _EPS)
    shift = beta - mean * scale
    return scale, shift


def _fused_block_kernel(x_ref, cols_ref, w1_ref, w1k_ref, w2f_ref, w3_ref,
                        wsc_ref, gb_ref, o_ref, *, n_full, n_out):
    """Whole ResNet_D_Block forward in one kernel.

    x_ref    : (C, RFp)    bf16, all input positions (for bn1 stats), lane-padded
    cols_ref : (9*C, ROp)  bf16, im2col of x, tap-major rows (tap = kh*3+kw)
    w1_ref   : (C, C)      bf16, conv1 1x1 weight, "out = W @ in" form
    w1k_ref  : (9C, 9C)    bf16, kron(I9, w1) block-diagonal
    w2f_ref  : (C, 9C)     bf16, conv2 3x3 weight flattened tap-major
    w3_ref   : (C, C)      bf16, conv3 1x1 weight
    wsc_ref  : (C, C)      bf16, shortcut 1x1 weight
    gb_ref   : (C, 8)      f32, columns: g1, be1, g2, be2, g3, be3, gsc, besc
    o_ref    : (C, ROp)    f32 (padded lanes hold garbage; sliced off in wrapper)
    """
    f32 = jnp.float32
    bf16 = jnp.bfloat16
    C = w1_ref.shape[0]

    x = x_ref[...]          # (C, RFp) bf16
    cols = cols_ref[...]    # (9C, ROp) bf16
    gb = gb_ref[...]        # (C, 8) f32

    rf = x.shape[1]
    ro = cols.shape[1]

    # Lane-validity masks: padded lanes must not perturb BN batch statistics.
    mask_f = (jax.lax.broadcasted_iota(jnp.int32, (1, rf), 1) < n_full).astype(f32)
    mask_o = (jax.lax.broadcasted_iota(jnp.int32, (1, ro), 1) < n_out).astype(f32)

    # --- conv1 (1x1) over ALL positions -> bn1 batch statistics --------------
    # (conv biases are omitted everywhere: BN with batch stats cancels them.)
    c1_full = jnp.dot(w1_ref[...], x, preferred_element_type=f32)      # (C, RFp)
    scale1, shift1 = _bn_scale_shift(c1_full, gb[:, 0:1], gb[:, 1:2], n_full, mask_f)

    # --- conv1 on the 9 tap windows: ONE 72-deep GEMM (kron(I9, w1)) ---------
    c1_cols = jnp.dot(w1k_ref[...], cols, preferred_element_type=f32)  # (9C, ROp)
    # bn1 affine + ReLU applied once; (C,1) scale/shift broadcast over a
    # (9, C, ROp) view (no per-tap broadcasts, no sublane tiling of params).
    a1 = jnp.maximum(c1_cols.reshape(9, C, ro) * scale1 + shift1, 0.0)
    a1_cols = a1.reshape(9 * C, ro).astype(bf16)

    # --- conv2 (3x3, stride 2): ONE GEMM with tap-major flattened weights ----
    acc = jnp.dot(w2f_ref[...], a1_cols, preferred_element_type=f32)   # (C, ROp)
    scale2, shift2 = _bn_scale_shift(acc, gb[:, 2:3], gb[:, 3:4], n_out, mask_o)
    a2 = jnp.maximum(acc * scale2 + shift2, 0.0)

    # --- conv3 (1x1) + bn3 (no relu yet) --------------------------------------
    c3 = jnp.dot(w3_ref[...], a2.astype(bf16), preferred_element_type=f32)
    scale3, shift3 = _bn_scale_shift(c3, gb[:, 4:5], gb[:, 5:6], n_out, mask_o)
    b3 = c3 * scale3 + shift3

    # --- shortcut: avgpool(2,2) + conv_shortcut (1x1) + bn_shortcut ----------
    # The 2x2 pool corners are exactly taps (0,0),(0,1),(1,0),(1,1) = 0,1,3,4.
    pooled = 0.25 * (cols[0:C, :].astype(f32) + cols[C:2 * C, :].astype(f32)
                     + cols[3 * C:4 * C, :].astype(f32)
                     + cols[4 * C:5 * C, :].astype(f32))
    scc = jnp.dot(wsc_ref[...], pooled.astype(bf16), preferred_element_type=f32)
    ssc, hsc = _bn_scale_shift(scc, gb[:, 6:7], gb[:, 7:8], n_out, mask_o)
    sc = scc * ssc + hsc

    # --- residual add + relu (lane-dense 128-wide store) ----------------------
    o_ref[...] = jnp.maximum(b3 + sc, 0.0)


# ------------------------------ parameters -----------------------------------

def init_params(key, in_channels, out_channels):
    ks = jax.random.split(key, 16)

    def nrm(k, shape, scale=0.1):
        return scale * jax.random.normal(k, shape, dtype=jnp.float32)

    p = {}
    # conv1: 1x1, in -> in      (PyTorch weight layout: (Cout, Cin, kh, kw))
    p["w1"] = nrm(ks[0], (in_channels, in_channels, 1, 1))
    p["b1"] = nrm(ks[1], (in_channels,))          # cancelled by bn1 (unused)
    p["g1"] = 1.0 + nrm(ks[2], (out_channels,))
    p["be1"] = nrm(ks[3], (out_channels,))
    # conv2: 3x3 stride 2, in -> out
    p["w2"] = nrm(ks[4], (out_channels, in_channels, 3, 3))
    p["b2"] = nrm(ks[5], (out_channels,))         # cancelled by bn2 (unused)
    p["g2"] = 1.0 + nrm(ks[6], (out_channels,))
    p["be2"] = nrm(ks[7], (out_channels,))
    # conv3: 1x1, out -> out
    p["w3"] = nrm(ks[8], (out_channels, out_channels, 1, 1))
    p["b3"] = nrm(ks[9], (out_channels,))         # cancelled by bn3 (unused)
    p["g3"] = 1.0 + nrm(ks[10], (out_channels,))
    p["be3"] = nrm(ks[11], (out_channels,))
    # shortcut conv: 1x1, in -> out
    p["wsc"] = nrm(ks[12], (out_channels, in_channels, 1, 1))
    p["bsc"] = nrm(ks[13], (out_channels,))       # cancelled by bn_shortcut (unused)
    p["gsc"] = 1.0 + nrm(ks[14], (out_channels,))
    p["besc"] = nrm(ks[15], (out_channels,))
    return p


# ------------------------------ forward pass ---------------------------------

def _vmem_spec():
    return pl.BlockSpec(memory_space=pltpu.MemorySpace.VMEM)


def _round_up(v, m):
    return ((v + m - 1) // m) * m


@jax.jit
def resnet_d_block_forward(x_nchw, p):
    N, Cin, H, W = x_nchw.shape
    Cout = p["w3"].shape[0]
    assert Cin == Cout, "bn1(out_channels) applied to a Cin tensor => Cin==Cout"
    assert H % 2 == 1 and W % 2 == 1, "odd spatial size needed (see header note)"
    C = Cin
    Ho = (H - 3) // 2 + 1
    Wo = (W - 3) // 2 + 1
    assert (H // 2, W // 2) == (Ho, Wo)

    x = x_nchw.astype(jnp.float32)
    n_full = N * H * W
    n_out = N * Ho * Wo
    rf_pad = _round_up(n_full, 128)   # lane-dense / unmasked loads
    ro_pad = _round_up(n_out, 128)    # lane-dense / unmasked stores
    bf16 = jnp.bfloat16

    # Channel-major working layout: channels on sublanes, positions on lanes.
    x_cnhw = x.transpose(1, 0, 2, 3)                                  # (C, N, H, W)
    x_t = x_cnhw.reshape(C, n_full)
    x_t = jnp.pad(x_t, ((0, 0), (0, rf_pad - n_full))).astype(bf16)   # (C, RFp)

    # im2col of x for conv2's 9 taps, tap-major rows; built once from x so the
    # conv1+bn1+relu activations never exist in HBM.
    taps = [x_cnhw[:, :, kh:kh + 2 * Ho - 1:2, kw:kw + 2 * Wo - 1:2]  # (C, N, Ho, Wo)
            for kh in range(3) for kw in range(3)]
    cols_t = jnp.concatenate(taps, axis=0).reshape(9 * C, n_out)      # (9C, R2)
    cols_t = jnp.pad(cols_t, ((0, 0), (0, ro_pad - n_out))).astype(bf16)

    # Weights in "out = W @ in" form; conv biases omitted (cancelled by BN).
    w1_f32 = p["w1"][:, :, 0, 0]                                       # (C, C)
    w1 = w1_f32.astype(bf16)
    # kron(I9, w1): block-diagonal so conv1 on all 9 tap windows is one GEMM.
    w1k = jnp.kron(jnp.eye(9, dtype=jnp.float32), w1_f32).astype(bf16)  # (9C, 9C)
    # conv2 weight flattened tap-major: w2f[:, t*Cin + c] = w2[o, c, kh, kw].
    w2f = p["w2"].transpose(0, 2, 3, 1).reshape(Cout, 9 * Cin).astype(bf16)
    w3 = p["w3"][:, :, 0, 0].astype(bf16)
    wsc = p["wsc"][:, :, 0, 0].astype(bf16)

    # All four BN gamma/beta packed into a single (C, 8) f32 operand.
    gb = jnp.stack([p["g1"], p["be1"], p["g2"], p["be2"],
                    p["g3"], p["be3"], p["gsc"], p["besc"]],
                   axis=1).astype(jnp.float32)

    kernel = functools.partial(_fused_block_kernel, n_full=n_full, n_out=n_out)
    out = pl.pallas_call(
        kernel,
        out_shape=jax.ShapeDtypeStruct((Cout, ro_pad), jnp.float32),
        in_specs=[_vmem_spec()] * 8,
        out_specs=_vmem_spec(),
    )(x_t, cols_t, w1, w1k, w2f, w3, wsc, gb)

    out = out[:, :n_out]                                              # drop padded lanes
    # Original forward() has no `return`; we return the last computed `out`.
    return out.reshape(Cout, N, Ho, Wo).transpose(1, 0, 2, 3)         # NCHW


if __name__ == "__main__":
    key = jax.random.PRNGKey(0)
    kx, kp = jax.random.split(key)

    N, C, H, W = 2, 8, 15, 15  # in_channels == out_channels, odd spatial size
    x = jax.random.normal(kx, (N, C, H, W), dtype=jnp.float32)
    params = init_params(kp, C, C)

    y = resnet_d_block_forward(x, params)
    jax.block_until_ready(y)
    assert y.shape == (N, C, 7, 7), y.shape
    assert bool(jnp.all(jnp.isfinite(y)))
    print("KERNEL_OK")
</pallas_src>

<mosaic_0001>
module attributes {stable_mosaic.version = 11 : i64} {
  func.func @_fused_block_kernel(%arg0: memref<8x512xbf16, #tpu.memory_space<vmem>>, %arg1: memref<72x128xbf16, #tpu.memory_space<vmem>>, %arg2: memref<8x8xbf16, #tpu.memory_space<vmem>>, %arg3: memref<72x72xbf16, #tpu.memory_space<vmem>>, %arg4: memref<8x72xbf16, #tpu.memory_space<vmem>>, %arg5: memref<8x8xbf16, #tpu.memory_space<vmem>>, %arg6: memref<8x8xbf16, #tpu.memory_space<vmem>>, %arg7: memref<8x8xf32, #tpu.memory_space<vmem>>, %arg8: memref<8x128xf32, #tpu.memory_space<vmem>>) attributes {dimension_semantics = [], scalar_prefetch = 0 : i64, scratch_operands = 0 : i64, tpu.core_type = #tpu.core_type<tc>} {
    %c0 = arith.constant 0 : index
    %c0_0 = arith.constant 0 : index
    %0 = vector.load %arg0[%c0, %c0_0] : memref<8x512xbf16, #tpu.memory_space<vmem>>, vector<8x512xbf16>
    %c0_1 = arith.constant 0 : index
    %c0_2 = arith.constant 0 : index
    %1 = vector.load %arg1[%c0_1, %c0_2] : memref<72x128xbf16, #tpu.memory_space<vmem>>, vector<72x128xbf16>
    %c0_3 = arith.constant 0 : index
    %c0_4 = arith.constant 0 : index
    %2 = vector.load %arg7[%c0_3, %c0_4] : memref<8x8xf32, #tpu.memory_space<vmem>>, vector<8x8xf32>
    %3 = tpu.iota {dimensions = array<i32: 1>} : vector<1x512xi32>
    %c450_i32 = arith.constant 450 : i32
    %4 = vector.broadcast %c450_i32 : i32 to vector<1x512xi32>
    %5 = arith.cmpi slt, %3, %4 : vector<1x512xi32>
    %6 = arith.extui %5 : vector<1x512xi1> to vector<1x512xi32>
    %7 = arith.sitofp %6 : vector<1x512xi32> to vector<1x512xf32>
    %8 = tpu.iota {dimensions = array<i32: 1>} : vector<1x128xi32>
    %c98_i32 = arith.constant 98 : i32
    %9 = vector.broadcast %c98_i32 : i32 to vector<1x128xi32>
    %10 = arith.cmpi slt, %8, %9 : vector<1x128xi32>
    %11 = arith.extui %10 : vector<1x128xi1> to vector<1x128xi32>
    %12 = arith.sitofp %11 : vector<1x128xi32> to vector<1x128xf32>
    %c0_5 = arith.constant 0 : index
    %c0_6 = arith.constant 0 : index
    %13 = vector.load %arg2[%c0_5, %c0_6] : memref<8x8xbf16, #tpu.memory_space<vmem>>, vector<8x8xbf16>
    %cst = arith.constant dense<0.000000e+00> : vector<8x512xf32>
    %14 = tpu.matmul %13, %0, %cst {dimension_numbers = #tpu.dot_dimension_numbers<[1], [0], [0], [1], [0, 0, 1, 1], [], []>} : vector<8x8xbf16>, vector<8x512xbf16>, vector<8x512xf32> -> vector<8x512xf32>
    %15 = vector.extract_strided_slice %2 {offsets = [0, 0], sizes = [8, 1], strides = [1, 1]} : vector<8x8xf32> to vector<8x1xf32>
    %16 = vector.extract_strided_slice %2 {offsets = [0, 1], sizes = [8, 1], strides = [1, 1]} : vector<8x8xf32> to vector<8x1xf32>
    %17 = vector.broadcast %7 : vector<1x512xf32> to vector<8x512xf32>
    %18 = arith.mulf %14, %17 : vector<8x512xf32>
    %cst_7 = arith.constant dense<0.000000e+00> : vector<8xf32>
    %19 = vector.multi_reduction <add>, %18, %cst_7 [1] : vector<8x512xf32> to vector<8xf32>
    %20 = vector.shape_cast %19 : vector<8xf32> to vector<8x1xf32>
    %cst_8 = arith.constant 0.00222222228 : f32
    %21 = vector.broadcast %cst_8 : f32 to vector<8x1xf32>
    %22 = arith.mulf %20, %21 : vector<8x1xf32>
    %23 = vector.broadcast %22 : vector<8x1xf32> to vector<8x512xf32>
    %24 = arith.subf %18, %23 : vector<8x512xf32>
    %25 = vector.broadcast %7 : vector<1x512xf32> to vector<8x512xf32>
    %26 = arith.mulf %24, %25 : vector<8x512xf32>
    %27 = arith.mulf %26, %26 : vector<8x512xf32>
    %cst_9 = arith.constant dense<0.000000e+00> : vector<8xf32>
    %28 = vector.multi_reduction <add>, %27, %cst_9 [1] : vector<8x512xf32> to vector<8xf32>
    %29 = vector.shape_cast %28 : vector<8xf32> to vector<8x1xf32>
    %cst_10 = arith.constant 0.00222222228 : f32
    %30 = vector.broadcast %cst_10 : f32 to vector<8x1xf32>
    %31 = arith.mulf %29, %30 : vector<8x1xf32>
    %cst_11 = arith.constant 9.99999974E-6 : f32
    %32 = vector.broadcast %cst_11 : f32 to vector<8x1xf32>
    %33 = arith.addf %31, %32 : vector<8x1xf32>
    %34 = math.rsqrt %33 : vector<8x1xf32>
    %35 = arith.mulf %15, %34 : vector<8x1xf32>
    %36 = arith.mulf %22, %35 : vector<8x1xf32>
    %37 = arith.subf %16, %36 : vector<8x1xf32>
    %c0_12 = arith.constant 0 : index
    %c0_13 = arith.constant 0 : index
    %38 = vector.load %arg3[%c0_12, %c0_13] : memref<72x72xbf16, #tpu.memory_space<vmem>>, vector<72x72xbf16>
    %cst_14 = arith.constant dense<0.000000e+00> : vector<72x128xf32>
    %39 = tpu.matmul %38, %1, %cst_14 {dimension_numbers = #tpu.dot_dimension_numbers<[1], [0], [0], [1], [0, 0, 1, 1], [], []>} : vector<72x72xbf16>, vector<72x128xbf16>, vector<72x128xf32> -> vector<72x128xf32>
    %40 = vector.shape_cast %39 : vector<72x128xf32> to vector<9x8x128xf32>
    %41 = vector.shape_cast %35 : vector<8x1xf32> to vector<1x8x1xf32>
    %42 = vector.broadcast %41 : vector<1x8x1xf32> to vector<9x8x128xf32>
    %43 = arith.mulf %40, %42 : vector<9x8x128xf32>
    %44 = vector.shape_cast %37 : vector<8x1xf32> to vector<1x8x1xf32>
    %45 = vector.broadcast %44 : vector<1x8x1xf32> to vector<9x8x128xf32>
    %46 = arith.addf %43, %45 : vector<9x8x128xf32>
    %cst_15 = arith.constant 0.000000e+00 : f32
    %47 = vector.broadcast %cst_15 : f32 to vector<9x8x128xf32>
    %48 = arith.maximumf %46, %47 : vector<9x8x128xf32>
    %49 = vector.shape_cast %48 : vector<9x8x128xf32> to vector<72x128xf32>
    %50 = arith.truncf %49 : vector<72x128xf32> to vector<72x128xbf16>
    %c0_16 = arith.constant 0 : index
    %c0_17 = arith.constant 0 : index
    %51 = vector.load %arg4[%c0_16, %c0_17] : memref<8x72xbf16, #tpu.memory_space<vmem>>, vector<8x72xbf16>
    %cst_18 = arith.constant dense<0.000000e+00> : vector<8x128xf32>
    %52 = tpu.matmul %51, %50, %cst_18 {dimension_numbers = #tpu.dot_dimension_numbers<[1], [0], [0], [1], [0, 0, 1, 1], [], []>} : vector<8x72xbf16>, vector<72x128xbf16>, vector<8x128xf32> -> vector<8x128xf32>
    %53 = vector.extract_strided_slice %2 {offsets = [0, 2], sizes = [8, 1], strides = [1, 1]} : vector<8x8xf32> to vector<8x1xf32>
    %54 = vector.extract_strided_slice %2 {offsets = [0, 3], sizes = [8, 1], strides = [1, 1]} : vector<8x8xf32> to vector<8x1xf32>
    %55 = vector.broadcast %12 : vector<1x128xf32> to vector<8x128xf32>
    %56 = arith.mulf %52, %55 : vector<8x128xf32>
    %cst_19 = arith.constant dense<0.000000e+00> : vector<8xf32>
    %57 = vector.multi_reduction <add>, %56, %cst_19 [1] : vector<8x128xf32> to vector<8xf32>
    %58 = vector.shape_cast %57 : vector<8xf32> to vector<8x1xf32>
    %cst_20 = arith.constant 0.0102040814 : f32
    %59 = vector.broadcast %cst_20 : f32 to vector<8x1xf32>
    %60 = arith.mulf %58, %59 : vector<8x1xf32>
    %61 = vector.broadcast %60 : vector<8x1xf32> to vector<8x128xf32>
    %62 = arith.subf %56, %61 : vector<8x128xf32>
    %63 = vector.broadcast %12 : vector<1x128xf32> to vector<8x128xf32>
    %64 = arith.mulf %62, %63 : vector<8x128xf32>
    %65 = arith.mulf %64, %64 : vector<8x128xf32>
    %cst_21 = arith.constant dense<0.000000e+00> : vector<8xf32>
    %66 = vector.multi_reduction <add>, %65, %cst_21 [1] : vector<8x128xf32> to vector<8xf32>
    %67 = vector.shape_cast %66 : vector<8xf32> to vector<8x1xf32>
    %cst_22 = arith.constant 0.0102040814 : f32
    %68 = vector.broadcast %cst_22 : f32 to vector<8x1xf32>
    %69 = arith.mulf %67, %68 : vector<8x1xf32>
    %cst_23 = arith.constant 9.99999974E-6 : f32
    %70 = vector.broadcast %cst_23 : f32 to vector<8x1xf32>
    %71 = arith.addf %69, %70 : vector<8x1xf32>
    %72 = math.rsqrt %71 : vector<8x1xf32>
    %73 = arith.mulf %53, %72 : vector<8x1xf32>
    %74 = arith.mulf %60, %73 : vector<8x1xf32>
    %75 = arith.subf %54, %74 : vector<8x1xf32>
    %76 = vector.broadcast %73 : vector<8x1xf32> to vector<8x128xf32>
    %77 = arith.mulf %52, %76 : vector<8x128xf32>
    %78 = vector.broadcast %75 : vector<8x1xf32> to vector<8x128xf32>
    %79 = arith.addf %77, %78 : vector<8x128xf32>
    %cst_24 = arith.constant 0.000000e+00 : f32
    %80 = vector.broadcast %cst_24 : f32 to vector<8x128xf32>
    %81 = arith.maximumf %79, %80 : vector<8x128xf32>
    %c0_25 = arith.constant 0 : index
    %c0_26 = arith.constant 0 : index
    %82 = vector.load %arg5[%c0_25, %c0_26] : memref<8x8xbf16, #tpu.memory_space<vmem>>, vector<8x8xbf16>
    %83 = arith.truncf %81 : vector<8x128xf32> to vector<8x128xbf16>
    %cst_27 = arith.constant dense<0.000000e+00> : vector<8x128xf32>
    %84 = tpu.matmul %82, %83, %cst_27 {dimension_numbers = #tpu.dot_dimension_numbers<[1], [0], [0], [1], [0, 0, 1, 1], [], []>} : vector<8x8xbf16>, vector<8x128xbf16>, vector<8x128xf32> -> vector<8x128xf32>
    %85 = vector.extract_strided_slice %2 {offsets = [0, 4], sizes = [8, 1], strides = [1, 1]} : vector<8x8xf32> to vector<8x1xf32>
    %86 = vector.extract_strided_slice %2 {offsets = [0, 5], sizes = [8, 1], strides = [1, 1]} : vector<8x8xf32> to vector<8x1xf32>
    %87 = vector.broadcast %12 : vector<1x128xf32> to vector<8x128xf32>
    %88 = arith.mulf %84, %87 : vector<8x128xf32>
    %cst_28 = arith.constant dense<0.000000e+00> : vector<8xf32>
    %89 = vector.multi_reduction <add>, %88, %cst_28 [1] : vector<8x128xf32> to vector<8xf32>
    %90 = vector.shape_cast %89 : vector<8xf32> to vector<8x1xf32>
    %cst_29 = arith.constant 0.0102040814 : f32
    %91 = vector.broadcast %cst_29 : f32 to vector<8x1xf32>
    %92 = arith.mulf %90, %91 : vector<8x1xf32>
    %93 = vector.broadcast %92 : vector<8x1xf32> to vector<8x128xf32>
    %94 = arith.subf %88, %93 : vector<8x128xf32>
    %95 = vector.broadcast %12 : vector<1x128xf32> to vector<8x128xf32>
    %96 = arith.mulf %94, %95 : vector<8x128xf32>
    %97 = arith.mulf %96, %96 : vector<8x128xf32>
    %cst_30 = arith.constant dense<0.000000e+00> : vector<8xf32>
    %98 = vector.multi_reduction <add>, %97, %cst_30 [1] : vector<8x128xf32> to vector<8xf32>
    %99 = vector.shape_cast %98 : vector<8xf32> to vector<8x1xf32>
    %cst_31 = arith.constant 0.0102040814 : f32
    %100 = vector.broadcast %cst_31 : f32 to vector<8x1xf32>
    %101 = arith.mulf %99, %100 : vector<8x1xf32>
    %cst_32 = arith.constant 9.99999974E-6 : f32
    %102 = vector.broadcast %cst_32 : f32 to vector<8x1xf32>
    %103 = arith.addf %101, %102 : vector<8x1xf32>
    %104 = math.rsqrt %103 : vector<8x1xf32>
    %105 = arith.mulf %85, %104 : vector<8x1xf32>
    %106 = arith.mulf %92, %105 : vector<8x1xf32>
    %107 = arith.subf %86, %106 : vector<8x1xf32>
    %108 = vector.broadcast %105 : vector<8x1xf32> to vector<8x128xf32>
    %109 = arith.mulf %84, %108 : vector<8x128xf32>
    %110 = vector.broadcast %107 : vector<8x1xf32> to vector<8x128xf32>
    %111 = arith.addf %109, %110 : vector<8x128xf32>
    %112 = vector.extract_strided_slice %1 {offsets = [0, 0], sizes = [8, 128], strides = [1, 1]} : vector<72x128xbf16> to vector<8x128xbf16>
    %113 = arith.extf %112 : vector<8x128xbf16> to vector<8x128xf32>
    %114 = vector.extract_strided_slice %1 {offsets = [8, 0], sizes = [8, 128], strides = [1, 1]} : vector<72x128xbf16> to vector<8x128xbf16>
    %115 = arith.extf %114 : vector<8x128xbf16> to vector<8x128xf32>
    %116 = arith.addf %113, %115 : vector<8x128xf32>
    %117 = vector.extract_strided_slice %1 {offsets = [24, 0], sizes = [8, 128], strides = [1, 1]} : vector<72x128xbf16> to vector<8x128xbf16>
    %118 = arith.extf %117 : vector<8x128xbf16> to vector<8x128xf32>
    %119 = arith.addf %116, %118 : vector<8x128xf32>
    %120 = vector.extract_strided_slice %1 {offsets = [32, 0], sizes = [8, 128], strides = [1, 1]} : vector<72x128xbf16> to vector<8x128xbf16>
    %121 = arith.extf %120 : vector<8x128xbf16> to vector<8x128xf32>
    %122 = arith.addf %119, %121 : vector<8x128xf32>
    %cst_33 = arith.constant 2.500000e-01 : f32
    %123 = vector.broadcast %cst_33 : f32 to vector<8x128xf32>
    %124 = arith.mulf %123, %122 : vector<8x128xf32>
    %c0_34 = arith.constant 0 : index
    %c0_35 = arith.constant 0 : index
    %125 = vector.load %arg6[%c0_34, %c0_35] : memref<8x8xbf16, #tpu.memory_space<vmem>>, vector<8x8xbf16>
    %126 = arith.truncf %124 : vector<8x128xf32> to vector<8x128xbf16>
    %cst_36 = arith.constant dense<0.000000e+00> : vector<8x128xf32>
    %127 = tpu.matmul %125, %126, %cst_36 {dimension_numbers = #tpu.dot_dimension_numbers<[1], [0], [0], [1], [0, 0, 1, 1], [], []>} : vector<8x8xbf16>, vector<8x128xbf16>, vector<8x128xf32> -> vector<8x128xf32>
    %128 = vector.extract_strided_slice %2 {offsets = [0, 6], sizes = [8, 1], strides = [1, 1]} : vector<8x8xf32> to vector<8x1xf32>
    %129 = vector.extract_strided_slice %2 {offsets = [0, 7], sizes = [8, 1], strides = [1, 1]} : vector<8x8xf32> to vector<8x1xf32>
    %130 = vector.broadcast %12 : vector<1x128xf32> to vector<8x128xf32>
    %131 = arith.mulf %127, %130 : vector<8x128xf32>
    %cst_37 = arith.constant dense<0.000000e+00> : vector<8xf32>
    %132 = vector.multi_reduction <add>, %131, %cst_37 [1] : vector<8x128xf32> to vector<8xf32>
    %133 = vector.shape_cast %132 : vector<8xf32> to vector<8x1xf32>
    %cst_38 = arith.constant 0.0102040814 : f32
    %134 = vector.broadcast %cst_38 : f32 to vector<8x1xf32>
    %135 = arith.mulf %133, %134 : vector<8x1xf32>
    %136 = vector.broadcast %135 : vector<8x1xf32> to vector<8x128xf32>
    %137 = arith.subf %131, %136 : vector<8x128xf32>
    %138 = vector.broadcast %12 : vector<1x128xf32> to vector<8x128xf32>
    %139 = arith.mulf %137, %138 : vector<8x128xf32>
    %140 = arith.mulf %139, %139 : vector<8x128xf32>
    %cst_39 = arith.constant dense<0.000000e+00> : vector<8xf32>
    %141 = vector.multi_reduction <add>, %140, %cst_39 [1] : vector<8x128xf32> to vector<8xf32>
    %142 = vector.shape_cast %141 : vector<8xf32> to vector<8x1xf32>
    %cst_40 = arith.constant 0.0102040814 : f32
    %143 = vector.broadcast %cst_40 : f32 to vector<8x1xf32>
    %144 = arith.mulf %142, %143 : vector<8x1xf32>
    %cst_41 = arith.constant 9.99999974E-6 : f32
    %145 = vector.broadcast %cst_41 : f32 to vector<8x1xf32>
    %146 = arith.addf %144, %145 : vector<8x1xf32>
    %147 = math.rsqrt %146 : vector<8x1xf32>
    %148 = arith.mulf %128, %147 : vector<8x1xf32>
    %149 = arith.mulf %135, %148 : vector<8x1xf32>
    %150 = arith.subf %129, %149 : vector<8x1xf32>
    %151 = vector.broadcast %148 : vector<8x1xf32> to vector<8x128xf32>
    %152 = arith.mulf %127, %151 : vector<8x128xf32>
    %153 = vector.broadcast %150 : vector<8x1xf32> to vector<8x128xf32>
    %154 = arith.addf %152, %153 : vector<8x128xf32>
    %155 = arith.addf %111, %154 : vector<8x128xf32>
    %cst_42 = arith.constant 0.000000e+00 : f32
    %156 = vector.broadcast %cst_42 : f32 to vector<8x128xf32>
    %157 = arith.maximumf %155, %156 : vector<8x128xf32>
    %c0_43 = arith.constant 0 : index
    %c0_44 = arith.constant 0 : index
    %158 = vector.load %arg8[%c0_43, %c0_44] : memref<8x128xf32, #tpu.memory_space<vmem>>, vector<8x128xf32>
    tpu.vector_store %arg8[%c0_43, %c0_44], %157 {strides = array<i32>} : memref<8x128xf32, #tpu.memory_space<vmem>>, vector<8x128xf32>,
    return
  }
}

</mosaic_0001>

<llo_original>
// kernel: resnet_d_block_forward.1
$region0: #{resnet_d_block_forward.1}
  #allocation0 [shape = 'u32[]', space=smem, size = 0x4, offset = 0x4, fixed_abs, tag = 'smem constant byte address 0x4 - core index']
  #allocation1 [shape = 'u32[72,128]{1,0:T(1,128)}', space=vmem, size = 0x9000, scoped, tag = 'internal scratch']
  %s0 = inlined_call_operand.vmem [shape: bf16[8,512], index: 0, kind: input, shape index: {}]
  %s1 = inlined_call_operand.vmem [shape: bf16[72,128], index: 1, kind: input, shape index: {}]
  %s2 = inlined_call_operand.vmem [shape: bf16[8,8], index: 2, kind: input, shape index: {}]
  %s3 = inlined_call_operand.vmem [shape: bf16[72,72], index: 3, kind: input, shape index: {}]
  %s4 = inlined_call_operand.vmem [shape: bf16[8,72], index: 4, kind: input, shape index: {}]
  %s5 = inlined_call_operand.vmem [shape: bf16[8,8], index: 5, kind: input, shape index: {}]
  %s6 = inlined_call_operand.vmem [shape: bf16[8,8], index: 6, kind: input, shape index: {}]
  %s7 = inlined_call_operand.vmem [shape: f32[8,8], index: 7, kind: input, shape index: {}]
  %s8 = inlined_call_operand.vmem [shape: f32[8,128], index: 8, kind: output, shape index: {}]
  %s9 = sld [smem:[#allocation0]]
  $region42: #{resnet_d_block_forward.1} parent=0
    _
  %s11 = ssub.s32 1, %s9
  %s12 = scalar_select 0, %s11, %s9
  // Predicated region
  $region2: #{resnet_d_block_forward.1} parent=0 // pred_check
    _
  $region3: #{resnet_d_block_forward.1} parent=0 // pred_check_branch
    %14 = sbr.rel (0) target = $region5
  $region4: #{resnet_d_block_forward.1} parent=0 // pred_region
    _
  $region5: #{resnet_d_block_forward.1} parent=0 // pred_fallthru
    _
  // Predicated region
  $region6: #{resnet_d_block_forward.1} parent=0 // pred_check
    _
  $region7: #{resnet_d_block_forward.1} parent=0 // pred_check_branch
    %16 = sbr.rel (0) target = $region9
  $region8: #{resnet_d_block_forward.1} parent=0 // pred_region
    _
  $region9: #{resnet_d_block_forward.1} parent=0 // pred_fallthru
    _
  // Predicated region
  $region10: #{resnet_d_block_forward.1} parent=0 // pred_check
    _
  $region11: #{resnet_d_block_forward.1} parent=0 // pred_check_branch
    %18 = sbr.rel (0) target = $region13
  $region12: #{resnet_d_block_forward.1} parent=0 // pred_region
    _
  $region13: #{resnet_d_block_forward.1} parent=0 // pred_fallthru
    _
  // Predicated region
  $region14: #{resnet_d_block_forward.1} parent=0 // pred_check
    _
  $region15: #{resnet_d_block_forward.1} parent=0 // pred_check_branch
    %20 = sbr.rel (0) target = $region17
  $region16: #{resnet_d_block_forward.1} parent=0 // pred_region
    _
  $region17: #{resnet_d_block_forward.1} parent=0 // pred_fallthru
    _
  // Predicated region
  $region18: #{resnet_d_block_forward.1} parent=0 // pred_check
    _
  $region19: #{resnet_d_block_forward.1} parent=0 // pred_check_branch
    %22 = sbr.rel (0) target = $region21
  $region20: #{resnet_d_block_forward.1} parent=0 // pred_region
    _
  $region21: #{resnet_d_block_forward.1} parent=0 // pred_fallthru
    _
  // Predicated region
  $region22: #{resnet_d_block_forward.1} parent=0 // pred_check
    _
  $region23: #{resnet_d_block_forward.1} parent=0 // pred_check_branch
    %24 = sbr.rel (0) target = $region25
  $region24: #{resnet_d_block_forward.1} parent=0 // pred_region
    _
  $region25: #{resnet_d_block_forward.1} parent=0 // pred_fallthru
    _
  // Predicated region
  $region26: #{resnet_d_block_forward.1} parent=0 // pred_check
    _
  $region27: #{resnet_d_block_forward.1} parent=0 // pred_check_branch
    %26 = sbr.rel (0) target = $region29
  $region28: #{resnet_d_block_forward.1} parent=0 // pred_region
    _
  $region29: #{resnet_d_block_forward.1} parent=0 // pred_fallthru
    _
  // Predicated region
  $region30: #{resnet_d_block_forward.1} parent=0 // pred_check
    _
  $region31: #{resnet_d_block_forward.1} parent=0 // pred_check_branch
    %28 = sbr.rel (0) target = $region33
  $region32: #{resnet_d_block_forward.1} parent=0 // pred_region
    _
  $region33: #{resnet_d_block_forward.1} parent=0 // pred_fallthru
    _
  %v30 = vld [vmem:[%s0] sm:$0xff]
  %v31 = vld [vmem:[%s0 + $0x8] sm:$0xff]
  %v32 = vld [vmem:[%s1] sm:$0xf]
  %v33 = vld [vmem:[%s1 + $0x4] sm:$0xf]
  %v34 = vld [vmem:[%s1 + $0x8] sm:$0xf]
  %v35 = vld [vmem:[%s1 + $0xc] sm:$0xf]
  %v36 = vld [vmem:[%s1 + $0x10] sm:$0xf]
  %v37 = vld [vmem:[%s1 + $0x14] sm:$0xf]
  %v38 = vld [vmem:[%s1 + $0x18] sm:$0xf]
  %v39 = vld [vmem:[%s1 + $0x1c] sm:$0xf]
  %v40 = vld [vmem:[%s1 + $0x20] sm:$0xf]
  %v41 = vld [vmem:[%s7] sm:$0xff]
  %v42 = vlaneseq
  %v43 = vand.u32 %v42, 127
  %v44 = vadd.s32 %v43, 128
  %v45 = vadd.s32 %v43, 256
  %v46 = vadd.s32 %v43, 384
  %vm47 = vcmp.lt.s32.totalorder %v43, 450
  %vm48 = vcmp.lt.s32.totalorder %v44, 450
  %vm49 = vcmp.lt.s32.totalorder %v45, 450
  %vm50 = vcmp.lt.s32.totalorder %v46, 450
  %v51 = vsel %vm47, 1, 0
  %v52 = vsel %vm48, 1, 0
  %v53 = vsel %vm49, 1, 0
  %v54 = vsel %vm50, 1, 0
  %v55 = vcvt.s32.f32 %v51
  %v56 = vcvt.s32.f32 %v52
  %v57 = vcvt.s32.f32 %v53
  %v58 = vcvt.s32.f32 %v54
  %vm59 = vcmp.lt.s32.totalorder %v43, 98
  %v60 = vsel %vm59, 1, 0
  %v61 = vcvt.s32.f32 %v60
  %v62 = vld [vmem:[%s2] sm:$0xf]
  %v65 = vunpack.c.l.b16 %v30
  %v66 = vunpack.c.h.b16 %v30
  %v67 = vunpack.c.l.b16 %v31
  %v68 = vunpack.c.h.b16 %v31
  %v69 = vpack.c.b16 %v65, %v65
  %v70 = vpack.c.b16 %v66, %v66
  %v71 = vpack.c.b16 %v67, %v67
  %v72 = vpack.c.b16 %v68, %v68
  %vm73 = vcmask 64512
  %v75 = vsel %vm73, %v62, 0
  %vm77 = vcmask 1043456
  %v79 = vsel %vm77, %v69, 0
  %v82 = vsel %vm77, %v70, 0
  %v85 = vsel %vm77, %v71, 0
  %v88 = vsel %vm77, %v72, 0
  %90 = vmatpush.bf16.msra.mxu0 0
  %91 = vmatpush.bf16.msra.mxu0 0
  %92 = vmatpush.bf16.msra.mxu0 0
  %93 = vmatpush.bf16.msra.mxu0 0
  %94 = vmatpush.bf16.msra.mxu0 0
  %95 = vmatpush.bf16.msra.mxu0 0
  %96 = vmatpush.bf16.msra.mxu0 0
  %97 = vmatpush.bf16.msra.mxu0 %v79
  %98 = vmatmul.bf16.gmra.mxu0 %v75
  %v99 = vpop.f32.mrf.mxu0
  %v100 = vadd.f32 0.0, %v99
  %v101 = vpop.f32.mrf.mxu0
  %102 = vdwg.mxu0
  %103 = vmatpush.bf16.msra.mxu0 0
  %104 = vmatpush.bf16.msra.mxu0 0
  %105 = vmatpush.bf16.msra.mxu0 0
  %106 = vmatpush.bf16.msra.mxu0 0
  %107 = vmatpush.bf16.msra.mxu0 0
  %108 = vmatpush.bf16.msra.mxu0 0
  %109 = vmatpush.bf16.msra.mxu0 0
  %110 = vmatpush.bf16.msra.mxu0 %v82
  %111 = vmatmul.bf16.gmra.mxu0 %v75
  %v112 = vpop.f32.mrf.mxu0
  %v113 = vadd.f32 0.0, %v112
  %v114 = vpop.f32.mrf.mxu0
  %115 = vdwg.mxu0
  %116 = vmatpush.bf16.msra.mxu0 0
  %117 = vmatpush.bf16.msra.mxu0 0
  %118 = vmatpush.bf16.msra.mxu0 0
  %119 = vmatpush.bf16.msra.mxu0 0
  %120 = vmatpush.bf16.msra.mxu0 0
  %121 = vmatpush.bf16.msra.mxu0 0
  %122 = vmatpush.bf16.msra.mxu0 0
  %123 = vmatpush.bf16.msra.mxu0 %v85
  %124 = vmatmul.bf16.gmra.mxu0 %v75
  %v125 = vpop.f32.mrf.mxu0
  %v126 = vadd.f32 0.0, %v125
  %v127 = vpop.f32.mrf.mxu0
  %128 = vdwg.mxu0
  %129 = vmatpush.bf16.msra.mxu0 0
  %130 = vmatpush.bf16.msra.mxu0 0
  %131 = vmatpush.bf16.msra.mxu0 0
  %132 = vmatpush.bf16.msra.mxu0 0
  %133 = vmatpush.bf16.msra.mxu0 0
  %134 = vmatpush.bf16.msra.mxu0 0
  %135 = vmatpush.bf16.msra.mxu0 0
  %136 = vmatpush.bf16.msra.mxu0 %v88
  %137 = vmatmul.bf16.gmra.mxu0 %v75
  %v138 = vpop.f32.mrf.mxu0
  %v139 = vadd.f32 0.0, %v138
  %v140 = vpop.f32.mrf.mxu0
  %141 = vdwg.mxu0
  %v142 = vmul.f32 %v100, %v55
  %v143 = vmul.f32 %v113, %v56
  %v144 = vmul.f32 %v126, %v57
  %v145 = vmul.f32 %v139, %v58
  %v146 = vadd.f32 %v142, %v143
  %v147 = vadd.f32 %v146, %v144
  %v148 = vadd.f32 %v147, %v145
  %149 = vadd.xlane.f32.xlu0 %v148
  %v150 = vpop.xlane.xlu0 %149
  %v151 = vmul.f32 %v150, 0.0022222223
  %v152 = vsub.f32 %v142, %v151
  %v153 = vsub.f32 %v143, %v151
  %v154 = vsub.f32 %v144, %v151
  %v155 = vsub.f32 %v145, %v151
  %v156 = vmul.f32 %v152, %v55
  %v157 = vmul.f32 %v153, %v56
  %v158 = vmul.f32 %v154, %v57
  %v159 = vmul.f32 %v155, %v58
  %v160 = vmul.f32 %v156, %v156
  %v161 = vmul.f32 %v157, %v157
  %v162 = vmul.f32 %v158, %v158
  %v163 = vmul.f32 %v159, %v159
  %v164 = vadd.f32 %v160, %v161
  %v165 = vadd.f32 %v164, %v162
  %v166 = vadd.f32 %v165, %v163
  %167 = vadd.xlane.f32.xlu0 %v166
  %v168 = vpop.xlane.xlu0 %167
  %v169 = vmul.f32 %v168, 0.0022222223
  %v170 = vadd.f32 %v169, 1e-05
  %v171 = vrsqrt.pop %v170
  %v172 = vmul.f32 %v171, %v170
  %v173 = vmul.f32 %v172, %v171
  %v174 = vmul.f32 0.5, %v173
  %v175 = vsub.f32 1.5, %v174
  %v176 = vmul.f32 %v171, %v175
  %vm177 = vweird.f32 %v170
  %vm178 = vweird.f32 %v171
  %vm179 = vmor %vm177, %vm178
  %v180 = vsel %vm179, %v171, %v176
  %v181 = vmul.f32 %v41, %v180
  %v182 = vmul.f32 %v151, %v181
  %184 = vrot.lane.b32.xlu0 %v182, 1
  %v185 = vpop.permute.xlu0 %184
  %v187 = vsub.f32 %v41, %v185
  %v188 = vld [vmem:[%s3] sm:$0xf]
  %v189 = vld [vmem:[%s3 + $0x4] sm:$0xf]
  %v190 = vld [vmem:[%s3 + $0x8] sm:$0xf]
  %v191 = vld [vmem:[%s3 + $0xc] sm:$0xf]
  %v192 = vld [vmem:[%s3 + $0x10] sm:$0xf]
  %v193 = vld [vmem:[%s3 + $0x14] sm:$0xf]
  %v194 = vld [vmem:[%s3 + $0x18] sm:$0xf]
  %v195 = vld [vmem:[%s3 + $0x1c] sm:$0xf]
  %v196 = vld [vmem:[%s3 + $0x20] sm:$0xf]
  %v206 = vunpack.c.l.b16 %v188
  %v207 = vunpack.c.l.b16 %v189
  %v208 = vunpack.c.l.b16 %v190
  %v209 = vunpack.c.l.b16 %v191
  %v210 = vunpack.c.l.b16 %v192
  %v211 = vunpack.c.l.b16 %v193
  %v212 = vunpack.c.l.b16 %v194
  %v213 = vunpack.c.l.b16 %v195
  %v214 = vunpack.c.l.b16 %v196
  %v215 = vpack.c.b16 %v207, %v206
  %v216 = vpack.c.b16 %v209, %v208
  %v217 = vpack.c.b16 %v211, %v210
  %v218 = vpack.c.b16 %v213, %v212
  %v219 = vpack.c.b16 %v214, %v214
  %v229 = vunpack.c.l.b16 %v32
  %v230 = vunpack.c.l.b16 %v33
  %v231 = vunpack.c.l.b16 %v34
  %v232 = vunpack.c.l.b16 %v35
  %v233 = vunpack.c.l.b16 %v36
  %v234 = vunpack.c.l.b16 %v37
  %v235 = vunpack.c.l.b16 %v38
  %v236 = vunpack.c.l.b16 %v39
  %v237 = vunpack.c.l.b16 %v40
  %v238 = vpack.c.b16 %v230, %v229
  %v239 = vpack.c.b16 %v232, %v231
  %v240 = vpack.c.b16 %v234, %v233
  %v241 = vpack.c.b16 %v236, %v235
  %v242 = vpack.c.b16 %v237, %v237
  %vm247 = vcmask 588800
  %v249 = vsel %vm247, %v215, 0
  %v252 = vsel %vm247, %v216, 0
  %v255 = vsel %vm247, %v217, 0
  %v258 = vsel %vm247, %v218, 0
  %v261 = vsel %vm247, %v219, 0
  %v264 = vsel %vm77, %v242, 0
  %266 = vmatpush.bf16.msra.mxu0 0
  %267 = vmatpush.bf16.msra.mxu0 0
  %268 = vmatpush.bf16.msra.mxu0 0
  %269 = vmatpush.bf16.msra.mxu0 %v264
  %270 = vmatpush.bf16.msra.mxu0 %v241
  %271 = vmatpush.bf16.msra.mxu0 %v240
  %272 = vmatpush.bf16.msra.mxu0 %v239
  %273 = vmatpush.bf16.msra.mxu0 %v238
  %274 = vmatmul.bf16.gmra.mxu0 %v249
  %v275 = vpop.f32.mrf.mxu0
  %v276 = vadd.f32 0.0, %v275
  %v277 = vpop.f32.mrf.mxu0
  %v278 = vadd.f32 0.0, %v277
  %279 = vmatmul.bf16.gmra.mxu0 %v252
  %v280 = vpop.f32.mrf.mxu0
  %v281 = vadd.f32 0.0, %v280
  %v282 = vpop.f32.mrf.mxu0
  %v283 = vadd.f32 0.0, %v282
  %284 = vmatmul.bf16.gmra.mxu0 %v255
  %v285 = vpop.f32.mrf.mxu0
  %v286 = vadd.f32 0.0, %v285
  %v287 = vpop.f32.mrf.mxu0
  %v288 = vadd.f32 0.0, %v287
  %289 = vmatmul.bf16.gmra.mxu0 %v258
  %v290 = vpop.f32.mrf.mxu0
  %v291 = vadd.f32 0.0, %v290
  %v292 = vpop.f32.mrf.mxu0
  %v293 = vadd.f32 0.0, %v292
  %294 = vmatmul.bf16.gmra.mxu0 %v261
  %v295 = vpop.f32.mrf.mxu0
  %v296 = vadd.f32 0.0, %v295
  %v297 = vpop.f32.mrf.mxu0
  %298 = vdwg.mxu0
  %300 = vset.pattern.permute.xlu0 0
  %301 = vperm.xlu0 %300, %v181
  %v302 = vpop.permute.xlu0 %301
  %v304 = vmul.f32 %v276, %v302
  %v305 = vmul.f32 %v278, %v302
  %v306 = vmul.f32 %v281, %v302
  %v307 = vmul.f32 %v283, %v302
  %v308 = vmul.f32 %v286, %v302
  %v309 = vmul.f32 %v288, %v302
  %v310 = vmul.f32 %v291, %v302
  %v311 = vmul.f32 %v293, %v302
  %v312 = vmul.f32 %v296, %v302
  %314 = vset.pattern.permute.xlu0 1
  %315 = vperm.xlu0 %314, %v187
  %v316 = vpop.permute.xlu0 %315
  %v318 = vadd.f32 %v304, %v316
  %v319 = vadd.f32 %v305, %v316
  %v320 = vadd.f32 %v306, %v316
  %v321 = vadd.f32 %v307, %v316
  %v322 = vadd.f32 %v308, %v316
  %v323 = vadd.f32 %v309, %v316
  %v324 = vadd.f32 %v310, %v316
  %v325 = vadd.f32 %v311, %v316
  %v326 = vadd.f32 %v312, %v316
  %v327 = vmax.f32 %v318, 0.0
  %v328 = vmax.f32 %v319, 0.0
  %v329 = vmax.f32 %v320, 0.0
  %v330 = vmax.f32 %v321, 0.0
  %v331 = vmax.f32 %v322, 0.0
  %v332 = vmax.f32 %v323, 0.0
  %v333 = vmax.f32 %v324, 0.0
  %v334 = vmax.f32 %v325, 0.0
  %v335 = vmax.f32 %v326, 0.0
  %v336 = vpack.c.bf16 %v328, %v327
  %v337 = vpack.c.bf16 %v330, %v329
  %v338 = vpack.c.bf16 %v332, %v331
  %v339 = vpack.c.bf16 %v334, %v333
  %v340 = vpack.c.bf16 %v335, %v335
  %v341 = vld [vmem:[%s4] sm:$0xf]
  %v343 = vsel %vm247, %v341, 0
  %v346 = vsel %vm77, %v340, 0
  %348 = vmatpush.bf16.msra.mxu0 0
  %349 = vmatpush.bf16.msra.mxu0 0
  %350 = vmatpush.bf16.msra.mxu0 0
  %351 = vmatpush.bf16.msra.mxu0 %v346
  %352 = vmatpush.bf16.msra.mxu0 %v339
  %353 = vmatpush.bf16.msra.mxu0 %v338
  %354 = vmatpush.bf16.msra.mxu0 %v337
  %355 = vmatpush.bf16.msra.mxu0 %v336
  %356 = vmatmul.bf16.gmra.mxu0 %v343
  %v357 = vpop.f32.mrf.mxu0
  %v358 = vadd.f32 0.0, %v357
  %v359 = vpop.f32.mrf.mxu0
  %360 = vdwg.mxu0
  %v361 = vmul.f32 %v358, %v61
  %362 = vadd.xlane.f32.xlu0 %v361
  %v363 = vpop.xlane.xlu0 %362
  %v364 = vmul.f32 %v363, 0.010204081
  %v365 = vsub.f32 %v361, %v364
  %v366 = vmul.f32 %v365, %v61
  %v367 = vmul.f32 %v366, %v366
  %368 = vadd.xlane.f32.xlu0 %v367
  %v369 = vpop.xlane.xlu0 %368
  %v370 = vmul.f32 %v369, 0.010204081
  %v371 = vadd.f32 %v370, 1e-05
  %v372 = vrsqrt.pop %v371
  %v373 = vmul.f32 %v372, %v371
  %v374 = vmul.f32 %v373, %v372
  %v375 = vmul.f32 0.5, %v374
  %v376 = vsub.f32 1.5, %v375
  %v377 = vmul.f32 %v372, %v376
  %vm378 = vweird.f32 %v371
  %vm379 = vweird.f32 %v372
  %vm380 = vmor %vm378, %vm379
  %v381 = vsel %vm380, %v372, %v377
  %v382 = vmul.f32 %v41, %v381
  %v383 = vmul.f32 %v364, %v382
  %385 = vrot.lane.b32.xlu0 %v383, 1
  %v386 = vpop.permute.xlu0 %385
  %v388 = vsub.f32 %v41, %v386
  %390 = vset.pattern.permute.xlu0 2
  %391 = vperm.xlu0 %390, %v382
  %v392 = vpop.permute.xlu0 %391
  %v394 = vmul.f32 %v358, %v392
  %396 = vset.pattern.permute.xlu0 3
  %397 = vperm.xlu0 %396, %v388
  %v398 = vpop.permute.xlu0 %397
  %v400 = vadd.f32 %v394, %v398
  %v401 = vmax.f32 %v400, 0.0
  %v402 = vld [vmem:[%s5] sm:$0xf]
  %v403 = vpack.c.bf16 %v401, %v401
  %v405 = vsel %vm73, %v402, 0
  %v408 = vsel %vm77, %v403, 0
  %410 = vmatpush.bf16.msra.mxu0 0
  %411 = vmatpush.bf16.msra.mxu0 0
  %412 = vmatpush.bf16.msra.mxu0 0
  %413 = vmatpush.bf16.msra.mxu0 0
  %414 = vmatpush.bf16.msra.mxu0 0
  %415 = vmatpush.bf16.msra.mxu0 0
  %416 = vmatpush.bf16.msra.mxu0 0
  %417 = vmatpush.bf16.msra.mxu0 %v408
  %418 = vmatmul.bf16.gmra.mxu0 %v405
  %v419 = vpop.f32.mrf.mxu0
  %v420 = vadd.f32 0.0, %v419
  %v421 = vpop.f32.mrf.mxu0
  %422 = vdwg.mxu0
  %v423 = vmul.f32 %v420, %v61
  %424 = vadd.xlane.f32.xlu0 %v423
  %v425 = vpop.xlane.xlu0 %424
  %v426 = vmul.f32 %v425, 0.010204081
  %v427 = vsub.f32 %v423, %v426
  %v428 = vmul.f32 %v427, %v61
  %v429 = vmul.f32 %v428, %v428
  %430 = vadd.xlane.f32.xlu0 %v429
  %v431 = vpop.xlane.xlu0 %430
  %v432 = vmul.f32 %v431, 0.010204081
  %v433 = vadd.f32 %v432, 1e-05
  %v434 = vrsqrt.pop %v433
  %v435 = vmul.f32 %v434, %v433
  %v436 = vmul.f32 %v435, %v434
  %v437 = vmul.f32 0.5, %v436
  %v438 = vsub.f32 1.5, %v437
  %v439 = vmul.f32 %v434, %v438
  %vm440 = vweird.f32 %v433
  %vm441 = vweird.f32 %v434
  %vm442 = vmor %vm440, %vm441
  %v443 = vsel %vm442, %v434, %v439
  %v444 = vmul.f32 %v41, %v443
  %v445 = vmul.f32 %v426, %v444
  %447 = vrot.lane.b32.xlu0 %v445, 1
  %v448 = vpop.permute.xlu0 %447
  %v450 = vsub.f32 %v41, %v448
  %452 = vset.pattern.permute.xlu0 4
  %453 = vperm.xlu0 %452, %v444
  %v454 = vpop.permute.xlu0 %453
  %v456 = vmul.f32 %v420, %v454
  %458 = vset.pattern.permute.xlu0 5
  %459 = vperm.xlu0 %458, %v450
  %v460 = vpop.permute.xlu0 %459
  %v462 = vadd.f32 %v456, %v460
  %v463 = vunpack.c.l.bf16 %v32
  %v464 = vunpack.c.l.bf16 %v33
  %v465 = vadd.f32 %v463, %v464
  %v466 = vunpack.c.l.bf16 %v35
  %v467 = vadd.f32 %v465, %v466
  %v468 = vunpack.c.l.bf16 %v36
  %v469 = vadd.f32 %v467, %v468
  %v470 = vmul.f32 %v469, 0.25
  %v471 = vld [vmem:[%s6] sm:$0xf]
  %v472 = vpack.c.bf16 %v470, %v470
  %v474 = vsel %vm73, %v471, 0
  %v477 = vsel %vm77, %v472, 0
  %479 = vmatpush.bf16.msra.mxu0 0
  %480 = vmatpush.bf16.msra.mxu0 0
  %481 = vmatpush.bf16.msra.mxu0 0
  %482 = vmatpush.bf16.msra.mxu0 0
  %483 = vmatpush.bf16.msra.mxu0 0
  %484 = vmatpush.bf16.msra.mxu0 0
  %485 = vmatpush.bf16.msra.mxu0 0
  %486 = vmatpush.bf16.msra.mxu0 %v477
  %487 = vmatmul.bf16.gmra.mxu0 %v474
  %v488 = vpop.f32.mrf.mxu0
  %v489 = vadd.f32 0.0, %v488
  %v490 = vpop.f32.mrf.mxu0
  %491 = vdwg.mxu0
  %v492 = vmul.f32 %v489, %v61
  %493 = vadd.xlane.f32.xlu0 %v492
  %v494 = vpop.xlane.xlu0 %493
  %v495 = vmul.f32 %v494, 0.010204081
  %v496 = vsub.f32 %v492, %v495
  %v497 = vmul.f32 %v496, %v61
  %v498 = vmul.f32 %v497, %v497
  %499 = vadd.xlane.f32.xlu0 %v498
  %v500 = vpop.xlane.xlu0 %499
  %v501 = vmul.f32 %v500, 0.010204081
  %v502 = vadd.f32 %v501, 1e-05
  %v503 = vrsqrt.pop %v502
  %v504 = vmul.f32 %v503, %v502
  %v505 = vmul.f32 %v504, %v503
  %v506 = vmul.f32 0.5, %v505
  %v507 = vsub.f32 1.5, %v506
  %v508 = vmul.f32 %v503, %v507
  %vm509 = vweird.f32 %v502
  %vm510 = vweird.f32 %v503
  %vm511 = vmor %vm509, %vm510
  %v512 = vsel %vm511, %v503, %v508
  %v513 = vmul.f32 %v41, %v512
  %v514 = vmul.f32 %v495, %v513
  %516 = vrot.lane.b32.xlu0 %v514, 1
  %v517 = vpop.permute.xlu0 %516
  %v519 = vsub.f32 %v41, %v517
  %521 = vset.pattern.permute.xlu0 6
  %522 = vperm.xlu0 %521, %v513
  %v523 = vpop.permute.xlu0 %522
  %v525 = vmul.f32 %v489, %v523
  %527 = vset.pattern.permute.xlu0 7
  %528 = vperm.xlu0 %527, %v519
  %v529 = vpop.permute.xlu0 %528
  %v531 = vadd.f32 %v525, %v529
  %v532 = vadd.f32 %v462, %v531
  %v533 = vmax.f32 %v532, 0.0
  %534 = vst [vmem:[%s8] sm:$0xff] %v533
  // Predicated region
  $region34: #{resnet_d_block_forward.1} parent=0 // pred_check
    _
  $region35: #{resnet_d_block_forward.1} parent=0 // pred_check_branch
    %536 = sbr.rel (0) target = $region37
  $region36: #{resnet_d_block_forward.1} parent=0 // pred_region
    _
  $region37: #{resnet_d_block_forward.1} parent=0 // pred_fallthru
    _
  // Predicated region
  $region38: #{resnet_d_block_forward.1} parent=0 // pred_check
    _
  $region39: #{resnet_d_block_forward.1} parent=0 // pred_check_branch
    %538 = sbr.rel (0) target = $region41
  $region40: #{resnet_d_block_forward.1} parent=0 // pred_region
    _
  $region41: #{resnet_d_block_forward.1} parent=0 // pred_fallthru
    _

</llo_original>
